<compile_context>
chip_gen: v7x
topology: tpu7x:2x2x1
jax: 0.10.0
libtpu: 0.0.40
codegen_flags: <defaults>
</compile_context>

<pallas_src>
import jax
import jax.numpy as jnp
from jax.experimental import pallas as pl
from jax.experimental.pallas import tpu as pltpu


# Total pipelined VMEM payload target (in + out, double buffered).
_PIPELINE_BUDGET_BYTES = 16 * 1024 * 1024
# Declared VMEM limit: <= 32 MiB works on v5e/v6e (128 MiB) and v7x (64 MiB).
_VMEM_LIMIT_BYTES = 32 * 1024 * 1024


def _normalizer_kernel(mean_ref, inv_ref, x_ref, o_ref):
    # mean_ref / inv_ref: (TILE_R, 1) f32 per-row params (broadcast over lanes)
    # x_ref / o_ref:      (TILE_R, TILE_L) slabs
    x = x_ref[...].astype(jnp.float32)
    y = (x - mean_ref[...]) * inv_ref[...]
    o_ref[...] = y.astype(o_ref.dtype)


def _choose_block(rows: int, hw: int, in_itemsize: int, out_itemsize: int):
    """Pick an (8,128)-aligned 2D block sized from the real pipelined footprint."""
    # footprint ~= 2 (double-buffer) * block_elems * (in + out itemsize)
    per_elem = 2 * (in_itemsize + out_itemsize)
    max_elems = max(_PIPELINE_BUDGET_BYTES // per_elem, 8 * 128)

    # Lane tile: full HW when it is not 128-aligned (only full-extent is legal),
    # else as wide as the budget allows (lane-dense -> unmasked vst).
    if hw % 128 != 0:
        tile_l = hw
    else:
        tile_l = min(hw, max((max_elems // 8) // 128 * 128, 128))

    # Row tile: multiple of 8 (full sublane occupancy) or full extent.
    if rows % 8 != 0:
        tile_r = rows
    else:
        tile_r = min(rows, max((max_elems // tile_l) // 8 * 8, 8))

    # Megacore (v7x): prefer >=2 steps along the leading "parallel" row axis
    # when a half-block still moves >=1 MiB per step.
    if (rows % 8 == 0
            and pl.cdiv(rows, tile_r) == 1
            and tile_r % 16 == 0
            and (tile_r // 2) * tile_l * in_itemsize >= (1 << 20)):
        tile_r //= 2

    return tile_r, tile_l


def normalizer_forward(images: jax.Array,
                       mean: jax.Array,
                       std: jax.Array,
                       *,
                       donate_images: bool = False) -> jax.Array:
    """images: (N, C, H, W); mean/std: length 1 or C (float, std > 0)."""
    N, C, H, W = images.shape
    HW = H * W
    rows = N * C

    out_dtype = jnp.result_type(images.dtype, jnp.float32)

    # Reproduce PyTorch broadcasting of mean/std (len 1 or len C), fold to
    # per-row (N*C, 1) params matching the (N*C, HW) row order (n-major).
    mean_c = jnp.broadcast_to(mean.astype(jnp.float32).reshape(-1), (C,))
    std_c = jnp.broadcast_to(std.astype(jnp.float32).reshape(-1), (C,))
    mean_rows = jnp.tile(mean_c, N).reshape(rows, 1)
    inv_rows = jnp.tile(1.0 / std_c, N).reshape(rows, 1)

    x = images.reshape(rows, HW)                  # sublane-full 2D layout
    tile_r, tile_l = _choose_block(rows, HW,
                                   jnp.dtype(images.dtype).itemsize,
                                   jnp.dtype(out_dtype).itemsize)
    grid = (pl.cdiv(rows, tile_r), pl.cdiv(HW, tile_l))

    # Only alias when the output buffer is layout/dtype compatible with x.
    aliases = {2: 0} if (donate_images and out_dtype == images.dtype) else {}

    # TODO(synk): if xprof shows exposed DMA between steps on v6e, add
    # pipeline_mode=pl.Buffered(3) on the image BlockSpec (spare VMEM exists).
    out = pl.pallas_call(
        _normalizer_kernel,
        out_shape=jax.ShapeDtypeStruct((rows, HW), out_dtype),
        grid_spec=pltpu.PrefetchScalarGridSpec(
            num_scalar_prefetch=0,
            grid=grid,
            in_specs=[
                pl.BlockSpec((tile_r, 1), lambda r, l: (r, 0)),     # mean
                pl.BlockSpec((tile_r, 1), lambda r, l: (r, 0)),     # 1/std
                pl.BlockSpec((tile_r, tile_l), lambda r, l: (r, l)),  # images
            ],
            out_specs=pl.BlockSpec((tile_r, tile_l), lambda r, l: (r, l)),
        ),
        compiler_params=pltpu.CompilerParams(
            dimension_semantics=("parallel", "parallel"),
            vmem_limit_bytes=_VMEM_LIMIT_BYTES,
        ),
        input_output_aliases=aliases,
    )(mean_rows, inv_rows, x)

    return out.reshape(N, C, H, W)


if __name__ == "__main__":
    key = jax.random.PRNGKey(0)
    N, C, H, W = 2, 4, 16, 16

    # Deterministic "parameters" (module __init__ takes python lists of floats).
    mean = jnp.array([0.485, 0.456, 0.406, 0.5], dtype=jnp.float32)   # len C
    std = jnp.array([0.229, 0.224, 0.225, 0.25], dtype=jnp.float32)   # len C

    images = jax.random.uniform(key, (N, C, H, W), dtype=jnp.float32)

    out = jax.block_until_ready(normalizer_forward(images, mean, std))

    # Reference check (plain JAX, mirrors torch broadcasting with [..., None, None]).
    ref = (images - mean[:, None, None]) / std[:, None, None]
    assert out.shape == images.shape
    assert out.dtype == jnp.result_type(images.dtype, jnp.float32)
    assert jnp.allclose(out, ref, atol=1e-5, rtol=1e-5)

    print("KERNEL_OK")
</pallas_src>

<mosaic_0001>
module attributes {stable_mosaic.version = 11 : i64} {
  func.func @_normalizer_kernel(%arg0: i32, %arg1: i32, %arg2: memref<8x1xf32, #tpu.memory_space<vmem>>, %arg3: memref<8x1xf32, #tpu.memory_space<vmem>>, %arg4: memref<8x256xf32, #tpu.memory_space<vmem>>, %arg5: memref<8x256xf32, #tpu.memory_space<vmem>>) attributes {dimension_semantics = [#tpu.dimension_semantics<parallel>, #tpu.dimension_semantics<parallel>], iteration_bounds = array<i64: 1, 1>, scalar_prefetch = 0 : i64, scratch_operands = 0 : i64, tpu.core_type = #tpu.core_type<tc>, window_params = [{transform_indices = @transform_0, window_bounds = array<i64: 8, 1>}, {transform_indices = @transform_1, window_bounds = array<i64: 8, 1>}, {transform_indices = @transform_2, window_bounds = array<i64: 8, 256>}, {transform_indices = @transform_3, window_bounds = array<i64: 8, 256>}]} {
    %c0 = arith.constant 0 : index
    %c0_0 = arith.constant 0 : index
    %0 = vector.load %arg4[%c0, %c0_0] : memref<8x256xf32, #tpu.memory_space<vmem>>, vector<8x256xf32>
    %c0_1 = arith.constant 0 : index
    %c0_2 = arith.constant 0 : index
    %1 = vector.load %arg2[%c0_1, %c0_2] : memref<8x1xf32, #tpu.memory_space<vmem>>, vector<8x1xf32>
    %2 = vector.broadcast %1 : vector<8x1xf32> to vector<8x256xf32>
    %3 = arith.subf %0, %2 : vector<8x256xf32>
    %c0_3 = arith.constant 0 : index
    %c0_4 = arith.constant 0 : index
    %4 = vector.load %arg3[%c0_3, %c0_4] : memref<8x1xf32, #tpu.memory_space<vmem>>, vector<8x1xf32>
    %5 = vector.broadcast %4 : vector<8x1xf32> to vector<8x256xf32>
    %6 = arith.mulf %3, %5 : vector<8x256xf32>
    %c0_5 = arith.constant 0 : index
    %c0_6 = arith.constant 0 : index
    %7 = vector.load %arg5[%c0_5, %c0_6] : memref<8x256xf32, #tpu.memory_space<vmem>>, vector<8x256xf32>
    tpu.vector_store %arg5[%c0_5, %c0_6], %6 {strides = array<i32>} : memref<8x256xf32, #tpu.memory_space<vmem>>, vector<8x256xf32>,
    return
  }
  func.func @transform_0(%arg0: i32, %arg1: i32) -> (i32, i32) {
    %c0_i32 = arith.constant 0 : i32
    %c0_i32_0 = arith.constant 0 : i32
    return %arg0, %c0_i32 : i32, i32
  }
  func.func @transform_1(%arg0: i32, %arg1: i32) -> (i32, i32) {
    %c0_i32 = arith.constant 0 : i32
    %c0_i32_0 = arith.constant 0 : i32
    return %arg0, %c0_i32 : i32, i32
  }
  func.func @transform_2(%arg0: i32, %arg1: i32) -> (i32, i32) {
    %c0_i32 = arith.constant 0 : i32
    return %arg0, %arg1 : i32, i32
  }
  func.func @transform_3(%arg0: i32, %arg1: i32) -> (i32, i32) {
    %c0_i32 = arith.constant 0 : i32
    return %arg0, %arg1 : i32, i32
  }
}

</mosaic_0001>

<llo_original>
// kernel: tpu_custom_call.1
$region0: #{tpu_custom_call.1}
  #allocation0 [shape = 'u32[]', space=smem, size = 0x4, offset = 0x4, fixed_abs, tag = 'smem constant byte address 0x4 - core index']
  #allocation1 [shape = 'u32[144,128]{1,0:T(1,128)}', space=vmem, size = 0x12000, scoped, tag = 'internal scratch']
  %s0 = inlined_call_operand.vmem [shape: f32[8,1], index: 0, kind: input, shape index: {}]
  %s1 = inlined_call_operand.vmem [shape: f32[8,1], index: 1, kind: input, shape index: {}]
  %s2 = inlined_call_operand.vmem [shape: f32[8,256], index: 2, kind: input, shape index: {}]
  %s3 = inlined_call_operand.hbm [shape: f32[8,256], index: 3, kind: output, shape index: {}]
  %s4 = sld [smem:[#allocation0]]
  $region22: #{tpu_custom_call.1} parent=0
    _
  %s6 = ssub.s32 1, %s4
  %s7 = scalar_select 0, %s6, %s4
  $region1: #{tpu_custom_call.1} parent=0
    #allocation2 [shape = 'u8[8192]{0}', space=vmem, size = 0x2000, scoped, tag = 'output window, operand 0, single buffered']
    #allocation3 [shape = 's32[1]{0}', space=sflag, size = 0x4, scoped, tag = 'scoped memory for tpu_custom_call.1']
    %8 = vsyncpa [#allocation3], 0
    // Predicated region
    $region2: #{tpu_custom_call.1} parent=1 // pred_check
      _
    $region3: #{tpu_custom_call.1} parent=1 // pred_check_branch
      %10 = sbr.rel (0) target = $region5
    $region4: #{tpu_custom_call.1} parent=1 // pred_region
      _
    $region5: #{tpu_custom_call.1} parent=1 // pred_fallthru
      _
    // Predicated region
    $region6: #{tpu_custom_call.1} parent=1 // pred_check
      _
    $region7: #{tpu_custom_call.1} parent=1 // pred_check_branch
      %12 = sbr.rel (0) target = $region9
    $region8: #{tpu_custom_call.1} parent=1 // pred_region
      _
    $region9: #{tpu_custom_call.1} parent=1 // pred_fallthru
      _
    // Predicated region
    $region10: #{tpu_custom_call.1} parent=1 // pred_check
      _
    $region11: #{tpu_custom_call.1} parent=1 // pred_check_branch
      %14 = sbr.rel (0) target = $region13
    $region12: #{tpu_custom_call.1} parent=1 // pred_region
      _
    $region13: #{tpu_custom_call.1} parent=1 // pred_fallthru
      _
    %v15 = vld [vmem:[%s2] sm:$0xff]
    %v16 = vld [vmem:[%s2 + $0x8] sm:$0xff]
    %v17 = vld [vmem:[%s0] sm:$0xff]
    %19 = vset.pattern.permute.xlu0 0
    %20 = vperm.xlu0 %19, %v17
    %v21 = vpop.permute.xlu0 %20
    %v23 = vsub.f32 %v15, %v21
    %v24 = vsub.f32 %v16, %v21
    %v25 = vld [vmem:[%s1] sm:$0xff]
    %27 = vset.pattern.permute.xlu0 0
    %28 = vperm.xlu0 %27, %v25
    %v29 = vpop.permute.xlu0 %28
    %v31 = vmul.f32 %v23, %v29
    %v32 = vmul.f32 %v24, %v29
    %33 = vst [vmem:[#allocation2] sm:$0xff] %v31
    %34 = vst [vmem:[#allocation2 + $0x8] sm:$0xff] %v32
    // Predicated region
    $region14: #{tpu_custom_call.1} parent=1 // pred_check
      _
    $region15: #{tpu_custom_call.1} parent=1 // pred_check_branch
      %36 = sbr.rel (0) target = $region17
    $region16: #{tpu_custom_call.1} parent=1 // pred_region
      %s38 = ssub.s32 256, 256
      %39 = vsyncadd [#allocation3], %s38
      %s41 = sshll.u32 [#allocation2], 4
      %s42 = int_to_ptr.vmem [resolvable:$true] %s41
      %44 = dma.vmem_to_hbm [thread:$0]  %s42, 256, %s3, [#allocation3]
    $region17: #{tpu_custom_call.1} parent=1 // pred_fallthru
      _
    // Predicated region
    $region18: #{tpu_custom_call.1} parent=1 // pred_check
      _
    $region19: #{tpu_custom_call.1} parent=1 // pred_check_branch
      %46 = sbr.rel (0) target = $region21
    $region20: #{tpu_custom_call.1} parent=1 // pred_region
      %47 = dma.done [#allocation3], 256
    $region21: #{tpu_custom_call.1} parent=1 // pred_fallthru
      _
    %48 = vsyncpa [#allocation3], 1

</llo_original>
